<compile_context>
chip_gen: v5e
topology: v5e:2x2
jax: 0.10.0
libtpu: 0.0.40
codegen_flags: <defaults>
</compile_context>

<pallas_src>
import numpy as np
import jax
import jax.numpy as jnp
from jax import lax
from jax.experimental import pallas as pl
from jax.experimental.pallas import tpu as pltpu

try:
    from scipy.optimize import linear_sum_assignment
    _HAVE_SCIPY = True
except Exception:  # pragma: no cover - fallback only
    _HAVE_SCIPY = False

# ---------------- configuration (small, consistent with the module) ------------
INPUT_DIM = 16
FILTERS = (32, 32, 32)          # num_gcn_layers = 3
NUM_LAYERS = len(FILTERS)
FEAT = FILTERS[0]               # common padded feature width (all layers 32)
MAX_NODES = 8                   # n1 == n2 == max_node_set_size
BATCH = 2
IS_SIG = True
BIG = 99999.0                   # insertion / deletion off-diagonal constant

N = MAX_NODES
M_ROWS = BATCH * 2 * N          # all (query|corpus) pairs stacked on sublanes
CHUNK = 16                      # lane stride per (layer, pair) output chunk
OUT_LANES = 128                 # one full vreg width -> single unmasked store
assert NUM_LAYERS * BATCH * CHUNK <= OUT_LANES, "output packing overflows 128 lanes"
# TODO(synk): if BATCH * NUM_LAYERS grows past 8 chunks, widen OUT_LANES to the
# next multiple of 128 (or add sublane rows) — keep the last dim a 128-multiple.


# ------------------------------ fused Pallas kernel -----------------------------
def gotsim_kernel(adj_ref, x_ref, w_ref, bdi_ref, out_ref):
    """Single grid step for the whole batch.

    adj_ref : (M_ROWS, M_ROWS) block-diag normalized adjacency
              [q0 | c0 | q1 | c1 | ...] on the sublane axis.
    x_ref   : (M_ROWS, FEAT)   node features (input dim zero-padded to FEAT).
    w_ref   : (L, FEAT, FEAT)  GCN weights (layer-0 weight zero-padded in rows).
    bdi_ref : (L, 3, FEAT)     rows: [bias, deletion_params, insertion_params].
    out_ref : (N, 128)         lane-packed per-(layer,pair) chunks of width 16:
              cols [0:N]  = main  (-q c^T), col N = delv (-q·del),
              col  N+1    = insv  (-c·ins), rest zero.
    """
    adj = adj_ref[...]                       # (M, M)
    h = x_ref[...]                           # (M, FEAT)

    pad_w = CHUNK - (N + 2)
    zpad_chunk = jnp.zeros((N, pad_w), jnp.float32) if pad_w > 0 else None

    chunks = []
    for li in range(NUM_LAYERS):             # static unroll (3 layers)
        bdi = bdi_ref[li]                    # (3, FEAT)
        b, dl, ins = bdi[0:1], bdi[1:2], bdi[2:3]

        # GCN layer for all pairs at once:  A_hat @ (H @ W) + b
        xw = jnp.dot(h, w_ref[li], preferred_element_type=jnp.float32)
        f = jnp.dot(adj, xw, preferred_element_type=jnp.float32) + b   # (M, FEAT)

        for j in range(BATCH):
            q = f[j * 2 * N: j * 2 * N + N]          # (N, FEAT) query features
            c = f[j * 2 * N + N: (j + 1) * 2 * N]    # (N, FEAT) corpus features

            # main similarity: -q @ c^T (contract last dims, no transpose)
            main = -lax.dot_general(q, c, (((1,), (1,)), ((), ())),
                                    preferred_element_type=jnp.float32)  # (N, N)
            delv = -jnp.sum(q * dl, axis=-1, keepdims=True)              # (N, 1)
            insv = -jnp.sum(c * ins, axis=-1, keepdims=True)             # (N, 1)

            parts = [main, delv, insv]
            if zpad_chunk is not None:
                parts.append(zpad_chunk)
            chunks.append(jnp.concatenate(parts, axis=1))                # (N, 16)

        if li < NUM_LAYERS - 1:
            h = jnp.maximum(f, 0.0)          # ReLU for next layer (dropout = id)

    used = NUM_LAYERS * BATCH * CHUNK
    if used < OUT_LANES:
        chunks.append(jnp.zeros((N, OUT_LANES - used), jnp.float32))
    out_ref[...] = jnp.concatenate(chunks, axis=1)   # one unmasked (8,128) store


def _pallas_fused(adj_full, x_full, w_stack, bdi_stack):
    return pl.pallas_call(
        gotsim_kernel,
        out_shape=jax.ShapeDtypeStruct((N, OUT_LANES), jnp.float32),
        grid=(1,),
        in_specs=[
            pl.BlockSpec((M_ROWS, M_ROWS), lambda i: (0, 0)),
            pl.BlockSpec((M_ROWS, FEAT), lambda i: (0, 0)),
            pl.BlockSpec((NUM_LAYERS, FEAT, FEAT), lambda i: (0, 0, 0)),
            pl.BlockSpec((NUM_LAYERS, 3, FEAT), lambda i: (0, 0, 0)),
        ],
        out_specs=pl.BlockSpec((N, OUT_LANES), lambda i: (0, 0)),
        compiler_params=pltpu.CompilerParams(dimension_semantics=("arbitrary",)),
    )(adj_full, x_full, w_stack, bdi_stack)


@jax.jit
def gotsim_device(q_x, q_adj, c_x, c_adj, w_stack, bdi_stack):
    """Single device dispatch: pack pairs + run the fused Pallas kernel."""
    B, n, fin = q_x.shape
    # Stack pairs on the sublane axis: rows = [q0 | c0 | q1 | c1 | ...]
    x_pair = jnp.stack([q_x, c_x], axis=1).reshape(2 * B * n, fin)
    x_full = jnp.pad(x_pair, ((0, 0), (0, FEAT - fin)))              # (M, FEAT)

    adj_blocks = jnp.stack([q_adj, c_adj], axis=1).reshape(2 * B, n, n)
    adj_full = jnp.zeros((2 * B * n, 2 * B * n), jnp.float32)
    for k in range(2 * B):                                           # static unroll
        adj_full = lax.dynamic_update_slice(adj_full, adj_blocks[k], (k * n, k * n))

    return _pallas_fused(adj_full, x_full, w_stack, bdi_stack)


# --------------------- host-side optimal assignment (lapjv equiv) ---------------
def _hungarian_fallback(cost):
    """Pure-python JV-style min-cost assignment (only if scipy is unavailable)."""
    cost = np.asarray(cost, dtype=np.float64)
    n = cost.shape[0]
    INF = 1e18
    u = np.zeros(n + 1); v = np.zeros(n + 1)
    p = np.zeros(n + 1, dtype=np.int64); way = np.zeros(n + 1, dtype=np.int64)
    for i in range(1, n + 1):
        p[0] = i; j0 = 0
        minv = np.full(n + 1, INF); used = np.zeros(n + 1, dtype=bool)
        while True:
            used[j0] = True
            i0 = p[j0]; delta = INF; j1 = -1
            for j in range(1, n + 1):
                if not used[j]:
                    cur = cost[i0 - 1, j - 1] - u[i0] - v[j]
                    if cur < minv[j]:
                        minv[j] = cur; way[j] = j0
                    if minv[j] < delta:
                        delta = minv[j]; j1 = j
            for j in range(n + 1):
                if used[j]:
                    u[p[j]] += delta; v[j] -= delta
                else:
                    minv[j] -= delta
            j0 = j1
            if p[j0] == 0:
                break
        while True:
            j1 = way[j0]; p[j0] = p[j1]; j0 = j1
            if j0 == 0:
                break
    row_to_col = np.zeros(n, dtype=np.int64)
    for j in range(1, n + 1):
        row_to_col[p[j] - 1] = j - 1
    return row_to_col


def dense_wasserstein_plan(cost_matrix):
    cost = np.asarray(cost_matrix, dtype=np.float64)
    if _HAVE_SCIPY:
        _, col_ind = linear_sum_assignment(cost)
        col_ind = np.asarray(col_ind)
    else:
        col_ind = _hungarian_fallback(cost)
    return np.eye(cost.shape[0], dtype=np.float32)[col_ind]


# --------------------------- parameter / input setup ---------------------------
def init_params(key):
    gcn_w, gcn_b, del_p, ins_p = [], [], [], []
    in_ch = INPUT_DIM
    for out_ch in FILTERS:
        key, kw = jax.random.split(key)
        w = jax.random.normal(kw, (in_ch, out_ch), jnp.float32) * (1.0 / np.sqrt(in_ch))
        gcn_w.append(w)
        gcn_b.append(jnp.zeros((out_ch,), jnp.float32))
        # match module __init__: insertion_params = ones, deletion_params = zeros
        ins_p.append(jnp.ones((out_ch,), jnp.float32))
        del_p.append(jnp.zeros((out_ch,), jnp.float32))
        in_ch = out_ch
    key, kw, kb = jax.random.split(key, 3)
    score_w = np.asarray(jax.random.normal(kw, (1, NUM_LAYERS), jnp.float32)) * 0.5
    score_b = np.asarray(jax.random.normal(kb, (1,), jnp.float32)) * 0.1

    # Pack parameters: weights padded to a common (FEAT, FEAT); bias/del/ins
    # stacked as rows of one (L, 3, FEAT) array -> only 2 kernel param inputs.
    w_stack = jnp.stack([
        jnp.pad(w, ((0, FEAT - w.shape[0]), (0, FEAT - w.shape[1]))) for w in gcn_w])
    bdi_stack = jnp.stack([
        jnp.stack([gcn_b[li], del_p[li], ins_p[li]]) for li in range(NUM_LAYERS)])
    return {"w_stack": w_stack, "bdi_stack": bdi_stack,
            "score_w": score_w, "score_b": score_b}


def make_graph_batch(key, sizes, max_n, feat_dim):
    B = len(sizes)
    k1, k2 = jax.random.split(key)
    x = jax.random.normal(k1, (B, max_n, feat_dim), jnp.float32)
    idx = jnp.arange(max_n)[None, :]
    mask = (idx < jnp.asarray(sizes)[:, None]).astype(jnp.float32)           # (B, N)
    x = x * mask[:, :, None]                                                 # zero padded nodes
    a = (jax.random.uniform(k2, (B, max_n, max_n)) < 0.4).astype(jnp.float32)
    a = jnp.triu(a, 1)
    a = a + jnp.transpose(a, (0, 2, 1))
    a = a * mask[:, :, None] * mask[:, None, :]
    a = a + jnp.eye(max_n, dtype=jnp.float32)[None] * mask[:, :, None]       # self loops
    deg = jnp.sum(a, axis=-1)
    dinv = jnp.where(deg > 0, 1.0 / jnp.sqrt(deg), 0.0)
    a_hat = a * dinv[:, :, None] * dinv[:, None, :]                          # D^-1/2 (A+I) D^-1/2
    return x, a_hat


# ------------------------------- forward pass ----------------------------------
def host_score(packed_h, params, q_sizes, c_sizes):
    """Decode the kernel output, run optimal assignment, score (all on host)."""
    mcost = np.zeros((BATCH, NUM_LAYERS), np.float64)
    for j in range(BATCH):
        s1, s2 = int(q_sizes[j]), int(c_sizes[j])
        for li in range(NUM_LAYERS):
            base = (li * BATCH + j) * CHUNK
            main = packed_h[:, base:base + N]          # -q c^T        (N, N)
            delv = packed_h[:, base + N]               # -q @ del      (N,)
            insv = packed_h[:, base + N + 1]           # -c @ ins      (N,)

            b_mat = np.full((s1, s1), BIG, np.float32)
            np.fill_diagonal(b_mat, delv[:s1])         # diag_embed + 99999 off-diag
            c_mat = np.full((s2, s2), BIG, np.float32)
            np.fill_diagonal(c_mat, insv[:s2])
            sim = np.block([[main[:s1, :s2], b_mat],
                            [c_mat, np.zeros((s2, s1), np.float32)]])
            plan = dense_wasserstein_plan(sim)
            mcost[j, li] = float(np.sum(sim * plan))

    sz = (np.asarray(q_sizes, np.float64) + np.asarray(c_sizes, np.float64))[:, None]
    mcost_norm = 2.0 * mcost / sz                                     # (B, L)
    scores = mcost_norm @ np.asarray(params["score_w"], np.float64).T \
             + np.asarray(params["score_b"], np.float64)              # Linear(L,1)
    scores = scores.reshape(-1)
    if IS_SIG:
        scores = 1.0 / (1.0 + np.exp(-scores))                        # sigmoid (host)
    return scores.astype(np.float32)


def gotsim_forward(params, q_x, q_adj, c_x, c_adj, q_sizes, c_sizes):
    packed = gotsim_device(q_x, q_adj, c_x, c_adj,
                           params["w_stack"], params["bdi_stack"])
    packed = jax.block_until_ready(packed)          # one kernel, one D2H transfer
    return host_score(np.asarray(packed), params, q_sizes, c_sizes)


# ------------------------------------ main --------------------------------------
if __name__ == "__main__":
    key = jax.random.PRNGKey(0)
    kp, kq, kc = jax.random.split(key, 3)

    params = init_params(kp)

    q_sizes = [5, 7]
    c_sizes = [6, 4]
    q_x, q_adj = make_graph_batch(kq, q_sizes, MAX_NODES, INPUT_DIM)
    c_x, c_adj = make_graph_batch(kc, c_sizes, MAX_NODES, INPUT_DIM)

    scores = gotsim_forward(params, q_x, q_adj, c_x, c_adj, q_sizes, c_sizes)
    assert scores.shape == (BATCH,)
    assert np.all(np.isfinite(scores))
    print("KERNEL_OK")
</pallas_src>

<mosaic_0001>
module attributes {stable_mosaic.version = 11 : i64} {
  func.func @gotsim_kernel(%arg0: i32, %arg1: memref<32x32xf32, #tpu.memory_space<vmem>>, %arg2: memref<32x32xf32, #tpu.memory_space<vmem>>, %arg3: memref<3x32x32xf32, #tpu.memory_space<vmem>>, %arg4: memref<3x3x32xf32, #tpu.memory_space<vmem>>, %arg5: memref<8x128xf32, #tpu.memory_space<vmem>>) attributes {dimension_semantics = [#tpu.dimension_semantics<arbitrary>], iteration_bounds = array<i64: 1>, scalar_prefetch = 0 : i64, scratch_operands = 0 : i64, tpu.core_type = #tpu.core_type<tc>, window_params = [{pipeline_mode = #tpu.pipeline_mode<synchronous>, transform_indices = @transform_0, window_bounds = array<i64: 32, 32>}, {pipeline_mode = #tpu.pipeline_mode<synchronous>, transform_indices = @transform_1, window_bounds = array<i64: 32, 32>}, {pipeline_mode = #tpu.pipeline_mode<synchronous>, transform_indices = @transform_2, window_bounds = array<i64: 3, 32, 32>}, {pipeline_mode = #tpu.pipeline_mode<synchronous>, transform_indices = @transform_3, window_bounds = array<i64: 3, 3, 32>}, {pipeline_mode = #tpu.pipeline_mode<synchronous>, transform_indices = @transform_4, window_bounds = array<i64: 8, 128>}]} {
    %c0 = arith.constant 0 : index
    %c0_0 = arith.constant 0 : index
    %0 = vector.load %arg1[%c0, %c0_0] : memref<32x32xf32, #tpu.memory_space<vmem>>, vector<32x32xf32>
    %c0_1 = arith.constant 0 : index
    %c0_2 = arith.constant 0 : index
    %1 = vector.load %arg2[%c0_1, %c0_2] : memref<32x32xf32, #tpu.memory_space<vmem>>, vector<32x32xf32>
    %cst = arith.constant 0.000000e+00 : f32
    %2 = vector.broadcast %cst : f32 to vector<8x6xf32>
    %c0_3 = arith.constant 0 : index
    %c0_4 = arith.constant 0 : index
    %c0_5 = arith.constant 0 : index
    %3 = vector.load %arg4[%c0_3, %c0_4, %c0_5] : memref<3x3x32xf32, #tpu.memory_space<vmem>>, vector<1x3x32xf32>
    %4 = vector.shape_cast %3 : vector<1x3x32xf32> to vector<3x32xf32>
    %5 = vector.extract_strided_slice %4 {offsets = [0, 0], sizes = [1, 32], strides = [1, 1]} : vector<3x32xf32> to vector<1x32xf32>
    %6 = vector.extract_strided_slice %4 {offsets = [1, 0], sizes = [1, 32], strides = [1, 1]} : vector<3x32xf32> to vector<1x32xf32>
    %7 = vector.extract_strided_slice %4 {offsets = [2, 0], sizes = [1, 32], strides = [1, 1]} : vector<3x32xf32> to vector<1x32xf32>
    %c0_6 = arith.constant 0 : index
    %c0_7 = arith.constant 0 : index
    %c0_8 = arith.constant 0 : index
    %8 = vector.load %arg3[%c0_6, %c0_7, %c0_8] : memref<3x32x32xf32, #tpu.memory_space<vmem>>, vector<1x32x32xf32>
    %9 = vector.shape_cast %8 : vector<1x32x32xf32> to vector<32x32xf32>
    %cst_9 = arith.constant dense<0.000000e+00> : vector<32x32xf32>
    %10 = tpu.matmul %1, %9, %cst_9 {dimension_numbers = #tpu.dot_dimension_numbers<[1], [0], [0], [1], [0, 0, 1, 1], [], []>} : vector<32x32xf32>, vector<32x32xf32>, vector<32x32xf32> -> vector<32x32xf32>
    %cst_10 = arith.constant dense<0.000000e+00> : vector<32x32xf32>
    %11 = tpu.matmul %0, %10, %cst_10 {dimension_numbers = #tpu.dot_dimension_numbers<[1], [0], [0], [1], [0, 0, 1, 1], [], []>} : vector<32x32xf32>, vector<32x32xf32>, vector<32x32xf32> -> vector<32x32xf32>
    %12 = vector.broadcast %5 : vector<1x32xf32> to vector<32x32xf32>
    %13 = arith.addf %11, %12 : vector<32x32xf32>
    %14 = vector.extract_strided_slice %13 {offsets = [0, 0], sizes = [8, 32], strides = [1, 1]} : vector<32x32xf32> to vector<8x32xf32>
    %15 = vector.extract_strided_slice %13 {offsets = [8, 0], sizes = [8, 32], strides = [1, 1]} : vector<32x32xf32> to vector<8x32xf32>
    %cst_11 = arith.constant dense<0.000000e+00> : vector<8x8xf32>
    %16 = tpu.matmul %14, %15, %cst_11 {dimension_numbers = #tpu.dot_dimension_numbers<[1], [1], [0], [0], [0, 0, 1, 0], [], []>} : vector<8x32xf32>, vector<8x32xf32>, vector<8x8xf32> -> vector<8x8xf32>
    %cst_12 = arith.constant 0.000000e+00 : f32
    %17 = vector.broadcast %cst_12 : f32 to vector<8x8xf32>
    %18 = arith.subf %17, %16 : vector<8x8xf32>
    %19 = vector.broadcast %6 : vector<1x32xf32> to vector<8x32xf32>
    %20 = arith.mulf %14, %19 : vector<8x32xf32>
    %cst_13 = arith.constant dense<0.000000e+00> : vector<8xf32>
    %21 = vector.multi_reduction <add>, %20, %cst_13 [1] : vector<8x32xf32> to vector<8xf32>
    %22 = vector.shape_cast %21 : vector<8xf32> to vector<8x1xf32>
    %cst_14 = arith.constant 0.000000e+00 : f32
    %23 = vector.broadcast %cst_14 : f32 to vector<8x1xf32>
    %24 = arith.subf %23, %22 : vector<8x1xf32>
    %25 = vector.broadcast %7 : vector<1x32xf32> to vector<8x32xf32>
    %26 = arith.mulf %15, %25 : vector<8x32xf32>
    %cst_15 = arith.constant dense<0.000000e+00> : vector<8xf32>
    %27 = vector.multi_reduction <add>, %26, %cst_15 [1] : vector<8x32xf32> to vector<8xf32>
    %28 = vector.shape_cast %27 : vector<8xf32> to vector<8x1xf32>
    %cst_16 = arith.constant 0.000000e+00 : f32
    %29 = vector.broadcast %cst_16 : f32 to vector<8x1xf32>
    %30 = arith.subf %29, %28 : vector<8x1xf32>
    %31 = tpu.concatenate %18, %24, %30, %2 in 1 : vector<8x8xf32>, vector<8x1xf32>, vector<8x1xf32>, vector<8x6xf32> -> vector<8x16xf32>
    %32 = vector.extract_strided_slice %13 {offsets = [16, 0], sizes = [8, 32], strides = [1, 1]} : vector<32x32xf32> to vector<8x32xf32>
    %33 = vector.extract_strided_slice %13 {offsets = [24, 0], sizes = [8, 32], strides = [1, 1]} : vector<32x32xf32> to vector<8x32xf32>
    %cst_17 = arith.constant dense<0.000000e+00> : vector<8x8xf32>
    %34 = tpu.matmul %32, %33, %cst_17 {dimension_numbers = #tpu.dot_dimension_numbers<[1], [1], [0], [0], [0, 0, 1, 0], [], []>} : vector<8x32xf32>, vector<8x32xf32>, vector<8x8xf32> -> vector<8x8xf32>
    %cst_18 = arith.constant 0.000000e+00 : f32
    %35 = vector.broadcast %cst_18 : f32 to vector<8x8xf32>
    %36 = arith.subf %35, %34 : vector<8x8xf32>
    %37 = vector.broadcast %6 : vector<1x32xf32> to vector<8x32xf32>
    %38 = arith.mulf %32, %37 : vector<8x32xf32>
    %cst_19 = arith.constant dense<0.000000e+00> : vector<8xf32>
    %39 = vector.multi_reduction <add>, %38, %cst_19 [1] : vector<8x32xf32> to vector<8xf32>
    %40 = vector.shape_cast %39 : vector<8xf32> to vector<8x1xf32>
    %cst_20 = arith.constant 0.000000e+00 : f32
    %41 = vector.broadcast %cst_20 : f32 to vector<8x1xf32>
    %42 = arith.subf %41, %40 : vector<8x1xf32>
    %43 = vector.broadcast %7 : vector<1x32xf32> to vector<8x32xf32>
    %44 = arith.mulf %33, %43 : vector<8x32xf32>
    %cst_21 = arith.constant dense<0.000000e+00> : vector<8xf32>
    %45 = vector.multi_reduction <add>, %44, %cst_21 [1] : vector<8x32xf32> to vector<8xf32>
    %46 = vector.shape_cast %45 : vector<8xf32> to vector<8x1xf32>
    %cst_22 = arith.constant 0.000000e+00 : f32
    %47 = vector.broadcast %cst_22 : f32 to vector<8x1xf32>
    %48 = arith.subf %47, %46 : vector<8x1xf32>
    %49 = tpu.concatenate %36, %42, %48, %2 in 1 : vector<8x8xf32>, vector<8x1xf32>, vector<8x1xf32>, vector<8x6xf32> -> vector<8x16xf32>
    %cst_23 = arith.constant 0.000000e+00 : f32
    %50 = vector.broadcast %cst_23 : f32 to vector<32x32xf32>
    %51 = arith.maximumf %13, %50 : vector<32x32xf32>
    %c1 = arith.constant 1 : index
    %c0_24 = arith.constant 0 : index
    %c0_25 = arith.constant 0 : index
    %52 = vector.load %arg4[%c1, %c0_24, %c0_25] : memref<3x3x32xf32, #tpu.memory_space<vmem>>, vector<1x3x32xf32>
    %53 = vector.shape_cast %52 : vector<1x3x32xf32> to vector<3x32xf32>
    %54 = vector.extract_strided_slice %53 {offsets = [0, 0], sizes = [1, 32], strides = [1, 1]} : vector<3x32xf32> to vector<1x32xf32>
    %55 = vector.extract_strided_slice %53 {offsets = [1, 0], sizes = [1, 32], strides = [1, 1]} : vector<3x32xf32> to vector<1x32xf32>
    %56 = vector.extract_strided_slice %53 {offsets = [2, 0], sizes = [1, 32], strides = [1, 1]} : vector<3x32xf32> to vector<1x32xf32>
    %c1_26 = arith.constant 1 : index
    %c0_27 = arith.constant 0 : index
    %c0_28 = arith.constant 0 : index
    %57 = vector.load %arg3[%c1_26, %c0_27, %c0_28] : memref<3x32x32xf32, #tpu.memory_space<vmem>>, vector<1x32x32xf32>
    %58 = vector.shape_cast %57 : vector<1x32x32xf32> to vector<32x32xf32>
    %cst_29 = arith.constant dense<0.000000e+00> : vector<32x32xf32>
    %59 = tpu.matmul %51, %58, %cst_29 {dimension_numbers = #tpu.dot_dimension_numbers<[1], [0], [0], [1], [0, 0, 1, 1], [], []>} : vector<32x32xf32>, vector<32x32xf32>, vector<32x32xf32> -> vector<32x32xf32>
    %cst_30 = arith.constant dense<0.000000e+00> : vector<32x32xf32>
    %60 = tpu.matmul %0, %59, %cst_30 {dimension_numbers = #tpu.dot_dimension_numbers<[1], [0], [0], [1], [0, 0, 1, 1], [], []>} : vector<32x32xf32>, vector<32x32xf32>, vector<32x32xf32> -> vector<32x32xf32>
    %61 = vector.broadcast %54 : vector<1x32xf32> to vector<32x32xf32>
    %62 = arith.addf %60, %61 : vector<32x32xf32>
    %63 = vector.extract_strided_slice %62 {offsets = [0, 0], sizes = [8, 32], strides = [1, 1]} : vector<32x32xf32> to vector<8x32xf32>
    %64 = vector.extract_strided_slice %62 {offsets = [8, 0], sizes = [8, 32], strides = [1, 1]} : vector<32x32xf32> to vector<8x32xf32>
    %cst_31 = arith.constant dense<0.000000e+00> : vector<8x8xf32>
    %65 = tpu.matmul %63, %64, %cst_31 {dimension_numbers = #tpu.dot_dimension_numbers<[1], [1], [0], [0], [0, 0, 1, 0], [], []>} : vector<8x32xf32>, vector<8x32xf32>, vector<8x8xf32> -> vector<8x8xf32>
    %cst_32 = arith.constant 0.000000e+00 : f32
    %66 = vector.broadcast %cst_32 : f32 to vector<8x8xf32>
    %67 = arith.subf %66, %65 : vector<8x8xf32>
    %68 = vector.broadcast %55 : vector<1x32xf32> to vector<8x32xf32>
    %69 = arith.mulf %63, %68 : vector<8x32xf32>
    %cst_33 = arith.constant dense<0.000000e+00> : vector<8xf32>
    %70 = vector.multi_reduction <add>, %69, %cst_33 [1] : vector<8x32xf32> to vector<8xf32>
    %71 = vector.shape_cast %70 : vector<8xf32> to vector<8x1xf32>
    %cst_34 = arith.constant 0.000000e+00 : f32
    %72 = vector.broadcast %cst_34 : f32 to vector<8x1xf32>
    %73 = arith.subf %72, %71 : vector<8x1xf32>
    %74 = vector.broadcast %56 : vector<1x32xf32> to vector<8x32xf32>
    %75 = arith.mulf %64, %74 : vector<8x32xf32>
    %cst_35 = arith.constant dense<0.000000e+00> : vector<8xf32>
    %76 = vector.multi_reduction <add>, %75, %cst_35 [1] : vector<8x32xf32> to vector<8xf32>
    %77 = vector.shape_cast %76 : vector<8xf32> to vector<8x1xf32>
    %cst_36 = arith.constant 0.000000e+00 : f32
    %78 = vector.broadcast %cst_36 : f32 to vector<8x1xf32>
    %79 = arith.subf %78, %77 : vector<8x1xf32>
    %80 = tpu.concatenate %67, %73, %79, %2 in 1 : vector<8x8xf32>, vector<8x1xf32>, vector<8x1xf32>, vector<8x6xf32> -> vector<8x16xf32>
    %81 = vector.extract_strided_slice %62 {offsets = [16, 0], sizes = [8, 32], strides = [1, 1]} : vector<32x32xf32> to vector<8x32xf32>
    %82 = vector.extract_strided_slice %62 {offsets = [24, 0], sizes = [8, 32], strides = [1, 1]} : vector<32x32xf32> to vector<8x32xf32>
    %cst_37 = arith.constant dense<0.000000e+00> : vector<8x8xf32>
    %83 = tpu.matmul %81, %82, %cst_37 {dimension_numbers = #tpu.dot_dimension_numbers<[1], [1], [0], [0], [0, 0, 1, 0], [], []>} : vector<8x32xf32>, vector<8x32xf32>, vector<8x8xf32> -> vector<8x8xf32>
    %cst_38 = arith.constant 0.000000e+00 : f32
    %84 = vector.broadcast %cst_38 : f32 to vector<8x8xf32>
    %85 = arith.subf %84, %83 : vector<8x8xf32>
    %86 = vector.broadcast %55 : vector<1x32xf32> to vector<8x32xf32>
    %87 = arith.mulf %81, %86 : vector<8x32xf32>
    %cst_39 = arith.constant dense<0.000000e+00> : vector<8xf32>
    %88 = vector.multi_reduction <add>, %87, %cst_39 [1] : vector<8x32xf32> to vector<8xf32>
    %89 = vector.shape_cast %88 : vector<8xf32> to vector<8x1xf32>
    %cst_40 = arith.constant 0.000000e+00 : f32
    %90 = vector.broadcast %cst_40 : f32 to vector<8x1xf32>
    %91 = arith.subf %90, %89 : vector<8x1xf32>
    %92 = vector.broadcast %56 : vector<1x32xf32> to vector<8x32xf32>
    %93 = arith.mulf %82, %92 : vector<8x32xf32>
    %cst_41 = arith.constant dense<0.000000e+00> : vector<8xf32>
    %94 = vector.multi_reduction <add>, %93, %cst_41 [1] : vector<8x32xf32> to vector<8xf32>
    %95 = vector.shape_cast %94 : vector<8xf32> to vector<8x1xf32>
    %cst_42 = arith.constant 0.000000e+00 : f32
    %96 = vector.broadcast %cst_42 : f32 to vector<8x1xf32>
    %97 = arith.subf %96, %95 : vector<8x1xf32>
    %98 = tpu.concatenate %85, %91, %97, %2 in 1 : vector<8x8xf32>, vector<8x1xf32>, vector<8x1xf32>, vector<8x6xf32> -> vector<8x16xf32>
    %cst_43 = arith.constant 0.000000e+00 : f32
    %99 = vector.broadcast %cst_43 : f32 to vector<32x32xf32>
    %100 = arith.maximumf %62, %99 : vector<32x32xf32>
    %c2 = arith.constant 2 : index
    %c0_44 = arith.constant 0 : index
    %c0_45 = arith.constant 0 : index
    %101 = vector.load %arg4[%c2, %c0_44, %c0_45] : memref<3x3x32xf32, #tpu.memory_space<vmem>>, vector<1x3x32xf32>
    %102 = vector.shape_cast %101 : vector<1x3x32xf32> to vector<3x32xf32>
    %103 = vector.extract_strided_slice %102 {offsets = [0, 0], sizes = [1, 32], strides = [1, 1]} : vector<3x32xf32> to vector<1x32xf32>
    %104 = vector.extract_strided_slice %102 {offsets = [1, 0], sizes = [1, 32], strides = [1, 1]} : vector<3x32xf32> to vector<1x32xf32>
    %105 = vector.extract_strided_slice %102 {offsets = [2, 0], sizes = [1, 32], strides = [1, 1]} : vector<3x32xf32> to vector<1x32xf32>
    %c2_46 = arith.constant 2 : index
    %c0_47 = arith.constant 0 : index
    %c0_48 = arith.constant 0 : index
    %106 = vector.load %arg3[%c2_46, %c0_47, %c0_48] : memref<3x32x32xf32, #tpu.memory_space<vmem>>, vector<1x32x32xf32>
    %107 = vector.shape_cast %106 : vector<1x32x32xf32> to vector<32x32xf32>
    %cst_49 = arith.constant dense<0.000000e+00> : vector<32x32xf32>
    %108 = tpu.matmul %100, %107, %cst_49 {dimension_numbers = #tpu.dot_dimension_numbers<[1], [0], [0], [1], [0, 0, 1, 1], [], []>} : vector<32x32xf32>, vector<32x32xf32>, vector<32x32xf32> -> vector<32x32xf32>
    %cst_50 = arith.constant dense<0.000000e+00> : vector<32x32xf32>
    %109 = tpu.matmul %0, %108, %cst_50 {dimension_numbers = #tpu.dot_dimension_numbers<[1], [0], [0], [1], [0, 0, 1, 1], [], []>} : vector<32x32xf32>, vector<32x32xf32>, vector<32x32xf32> -> vector<32x32xf32>
    %110 = vector.broadcast %103 : vector<1x32xf32> to vector<32x32xf32>
    %111 = arith.addf %109, %110 : vector<32x32xf32>
    %112 = vector.extract_strided_slice %111 {offsets = [0, 0], sizes = [8, 32], strides = [1, 1]} : vector<32x32xf32> to vector<8x32xf32>
    %113 = vector.extract_strided_slice %111 {offsets = [8, 0], sizes = [8, 32], strides = [1, 1]} : vector<32x32xf32> to vector<8x32xf32>
    %cst_51 = arith.constant dense<0.000000e+00> : vector<8x8xf32>
    %114 = tpu.matmul %112, %113, %cst_51 {dimension_numbers = #tpu.dot_dimension_numbers<[1], [1], [0], [0], [0, 0, 1, 0], [], []>} : vector<8x32xf32>, vector<8x32xf32>, vector<8x8xf32> -> vector<8x8xf32>
    %cst_52 = arith.constant 0.000000e+00 : f32
    %115 = vector.broadcast %cst_52 : f32 to vector<8x8xf32>
    %116 = arith.subf %115, %114 : vector<8x8xf32>
    %117 = vector.broadcast %104 : vector<1x32xf32> to vector<8x32xf32>
    %118 = arith.mulf %112, %117 : vector<8x32xf32>
    %cst_53 = arith.constant dense<0.000000e+00> : vector<8xf32>
    %119 = vector.multi_reduction <add>, %118, %cst_53 [1] : vector<8x32xf32> to vector<8xf32>
    %120 = vector.shape_cast %119 : vector<8xf32> to vector<8x1xf32>
    %cst_54 = arith.constant 0.000000e+00 : f32
    %121 = vector.broadcast %cst_54 : f32 to vector<8x1xf32>
    %122 = arith.subf %121, %120 : vector<8x1xf32>
    %123 = vector.broadcast %105 : vector<1x32xf32> to vector<8x32xf32>
    %124 = arith.mulf %113, %123 : vector<8x32xf32>
    %cst_55 = arith.constant dense<0.000000e+00> : vector<8xf32>
    %125 = vector.multi_reduction <add>, %124, %cst_55 [1] : vector<8x32xf32> to vector<8xf32>
    %126 = vector.shape_cast %125 : vector<8xf32> to vector<8x1xf32>
    %cst_56 = arith.constant 0.000000e+00 : f32
    %127 = vector.broadcast %cst_56 : f32 to vector<8x1xf32>
    %128 = arith.subf %127, %126 : vector<8x1xf32>
    %129 = tpu.concatenate %116, %122, %128, %2 in 1 : vector<8x8xf32>, vector<8x1xf32>, vector<8x1xf32>, vector<8x6xf32> -> vector<8x16xf32>
    %130 = vector.extract_strided_slice %111 {offsets = [16, 0], sizes = [8, 32], strides = [1, 1]} : vector<32x32xf32> to vector<8x32xf32>
    %131 = vector.extract_strided_slice %111 {offsets = [24, 0], sizes = [8, 32], strides = [1, 1]} : vector<32x32xf32> to vector<8x32xf32>
    %cst_57 = arith.constant dense<0.000000e+00> : vector<8x8xf32>
    %132 = tpu.matmul %130, %131, %cst_57 {dimension_numbers = #tpu.dot_dimension_numbers<[1], [1], [0], [0], [0, 0, 1, 0], [], []>} : vector<8x32xf32>, vector<8x32xf32>, vector<8x8xf32> -> vector<8x8xf32>
    %cst_58 = arith.constant 0.000000e+00 : f32
    %133 = vector.broadcast %cst_58 : f32 to vector<8x8xf32>
    %134 = arith.subf %133, %132 : vector<8x8xf32>
    %135 = vector.broadcast %104 : vector<1x32xf32> to vector<8x32xf32>
    %136 = arith.mulf %130, %135 : vector<8x32xf32>
    %cst_59 = arith.constant dense<0.000000e+00> : vector<8xf32>
    %137 = vector.multi_reduction <add>, %136, %cst_59 [1] : vector<8x32xf32> to vector<8xf32>
    %138 = vector.shape_cast %137 : vector<8xf32> to vector<8x1xf32>
    %cst_60 = arith.constant 0.000000e+00 : f32
    %139 = vector.broadcast %cst_60 : f32 to vector<8x1xf32>
    %140 = arith.subf %139, %138 : vector<8x1xf32>
    %141 = vector.broadcast %105 : vector<1x32xf32> to vector<8x32xf32>
    %142 = arith.mulf %131, %141 : vector<8x32xf32>
    %cst_61 = arith.constant dense<0.000000e+00> : vector<8xf32>
    %143 = vector.multi_reduction <add>, %142, %cst_61 [1] : vector<8x32xf32> to vector<8xf32>
    %144 = vector.shape_cast %143 : vector<8xf32> to vector<8x1xf32>
    %cst_62 = arith.constant 0.000000e+00 : f32
    %145 = vector.broadcast %cst_62 : f32 to vector<8x1xf32>
    %146 = arith.subf %145, %144 : vector<8x1xf32>
    %147 = tpu.concatenate %134, %140, %146, %2 in 1 : vector<8x8xf32>, vector<8x1xf32>, vector<8x1xf32>, vector<8x6xf32> -> vector<8x16xf32>
    %cst_63 = arith.constant 0.000000e+00 : f32
    %148 = vector.broadcast %cst_63 : f32 to vector<8x32xf32>
    %149 = tpu.concatenate %31, %49, %80, %98, %129, %147, %148 in 1 : vector<8x16xf32>, vector<8x16xf32>, vector<8x16xf32>, vector<8x16xf32>, vector<8x16xf32>, vector<8x16xf32>, vector<8x32xf32> -> vector<8x128xf32>
    %c0_64 = arith.constant 0 : index
    %c0_65 = arith.constant 0 : index
    %150 = vector.load %arg5[%c0_64, %c0_65] : memref<8x128xf32, #tpu.memory_space<vmem>>, vector<8x128xf32>
    tpu.vector_store %arg5[%c0_64, %c0_65], %149 {strides = array<i32>} : memref<8x128xf32, #tpu.memory_space<vmem>>, vector<8x128xf32>,
    return
  }
  func.func @transform_0(%arg0: i32) -> (i32, i32) {
    %c0_i32 = arith.constant 0 : i32
    %c0_i32_0 = arith.constant 0 : i32
    %c0_i32_1 = arith.constant 0 : i32
    return %c0_i32, %c0_i32_0 : i32, i32
  }
  func.func @transform_1(%arg0: i32) -> (i32, i32) {
    %c0_i32 = arith.constant 0 : i32
    %c0_i32_0 = arith.constant 0 : i32
    %c0_i32_1 = arith.constant 0 : i32
    return %c0_i32, %c0_i32_0 : i32, i32
  }
  func.func @transform_2(%arg0: i32) -> (i32, i32, i32) {
    %c0_i32 = arith.constant 0 : i32
    %c0_i32_0 = arith.constant 0 : i32
    %c0_i32_1 = arith.constant 0 : i32
    %c0_i32_2 = arith.constant 0 : i32
    return %c0_i32, %c0_i32_0, %c0_i32_1 : i32, i32, i32
  }
  func.func @transform_3(%arg0: i32) -> (i32, i32, i32) {
    %c0_i32 = arith.constant 0 : i32
    %c0_i32_0 = arith.constant 0 : i32
    %c0_i32_1 = arith.constant 0 : i32
    %c0_i32_2 = arith.constant 0 : i32
    return %c0_i32, %c0_i32_0, %c0_i32_1 : i32, i32, i32
  }
  func.func @transform_4(%arg0: i32) -> (i32, i32) {
    %c0_i32 = arith.constant 0 : i32
    %c0_i32_0 = arith.constant 0 : i32
    %c0_i32_1 = arith.constant 0 : i32
    return %c0_i32, %c0_i32_0 : i32, i32
  }
}

</mosaic_0001>

<llo_original>
// kernel: gotsim_device.1
$region0: #{gotsim_device.1}
  #allocation0 [shape = 'u32[]', space=smem, size = 0x4, offset = 0x4, fixed_abs, tag = 'smem constant byte address 0x4 - core index']
  #allocation1 [shape = 'u32[72,128]{1,0:T(1,128)}', space=vmem, size = 0x9000, scoped, tag = 'internal scratch']
  %s0 = inlined_call_operand.vmem [shape: f32[32,32], index: 0, kind: input, shape index: {}]
  %s1 = inlined_call_operand.vmem [shape: f32[32,32], index: 1, kind: input, shape index: {}]
  %s2 = inlined_call_operand.vmem [shape: f32[3,32,32], index: 2, kind: input, shape index: {}]
  %s3 = inlined_call_operand.vmem [shape: f32[3,3,32], index: 3, kind: input, shape index: {}]
  %s4 = inlined_call_operand.hbm [shape: f32[8,128], index: 4, kind: output, shape index: {}]
  %s5 = sld [smem:[#allocation0]]
  $region26: #{gotsim_device.1} parent=0
    _
  %s7 = ssub.s32 1, %s5
  %s8 = scalar_select 0, %s7, %s5
  $region1: #{gotsim_device.1} parent=0
    #allocation2 [shape = 'u8[4096]{0}', space=vmem, size = 0x1000, scoped, tag = 'output window, operand 0, single buffered']
    #allocation3 [shape = 's32[1]{0}', space=sflag, size = 0x4, scoped, tag = 'scoped memory for gotsim_device.1']
    %9 = vsyncpa [#allocation3], 0
    // Predicated region
    $region2: #{gotsim_device.1} parent=1 // pred_check
      _
    $region3: #{gotsim_device.1} parent=1 // pred_check_branch
      %11 = sbr.rel (0) target = $region5
    $region4: #{gotsim_device.1} parent=1 // pred_region
      _
    $region5: #{gotsim_device.1} parent=1 // pred_fallthru
      _
    // Predicated region
    $region6: #{gotsim_device.1} parent=1 // pred_check
      _
    $region7: #{gotsim_device.1} parent=1 // pred_check_branch
      %13 = sbr.rel (0) target = $region9
    $region8: #{gotsim_device.1} parent=1 // pred_region
      _
    $region9: #{gotsim_device.1} parent=1 // pred_fallthru
      _
    // Predicated region
    $region10: #{gotsim_device.1} parent=1 // pred_check
      _
    $region11: #{gotsim_device.1} parent=1 // pred_check_branch
      %15 = sbr.rel (0) target = $region13
    $region12: #{gotsim_device.1} parent=1 // pred_region
      _
    $region13: #{gotsim_device.1} parent=1 // pred_fallthru
      _
    // Predicated region
    $region14: #{gotsim_device.1} parent=1 // pred_check
      _
    $region15: #{gotsim_device.1} parent=1 // pred_check_branch
      %17 = sbr.rel (0) target = $region17
    $region16: #{gotsim_device.1} parent=1 // pred_region
      _
    $region17: #{gotsim_device.1} parent=1 // pred_fallthru
      _
    %v18 = vld [vmem:[%s0] sm:$0xff]
    %v19 = vld [vmem:[%s0 + $0x8] sm:$0xff]
    %v20 = vld [vmem:[%s0 + $0x10] sm:$0xff]
    %v21 = vld [vmem:[%s0 + $0x18] sm:$0xff]
    %v22 = vld [vmem:[%s1] sm:$0xff]
    %v23 = vld [vmem:[%s1 + $0x8] sm:$0xff]
    %v24 = vld [vmem:[%s1 + $0x10] sm:$0xff]
    %v25 = vld [vmem:[%s1 + $0x18] sm:$0xff]
    %v26 = vld [vmem:[%s3] sm:$0x7]
    %v27 = vld [vmem:[%s2] sm:$0xff]
    %v28 = vld [vmem:[%s2 + $0x8] sm:$0xff]
    %v29 = vld [vmem:[%s2 + $0x10] sm:$0xff]
    %v30 = vld [vmem:[%s2 + $0x18] sm:$0xff]
    %vm31 = vcmask 261120
    %v33 = vsel %vm31, %v22, 0
    %v36 = vsel %vm31, %v23, 0
    %v39 = vsel %vm31, %v24, 0
    %v42 = vsel %vm31, %v25, 0
    %44 = vmatpush.msra.mxu0 0.0
    %45 = vmatpush.msra.mxu0 0.0
    %46 = vmatpush.msra.mxu0 0.0
    %47 = vmatpush.msra.mxu0 0.0
    %48 = vmatpush.msra.mxu0 0.0
    %49 = vmatpush.msra.mxu0 0.0
    %50 = vmatpush.msra.mxu0 0.0
    %51 = vmatpush.msra.mxu0 0.0
    %52 = vmatpush.msra.mxu0 0.0
    %53 = vmatpush.msra.mxu0 0.0
    %54 = vmatpush.msra.mxu0 0.0
    %55 = vmatpush.msra.mxu0 0.0
    %56 = vmatpush.msra.mxu0 %v30
    %57 = vmatpush.msra.mxu0 %v29
    %58 = vmatpush.msra.mxu0 %v28
    %59 = vmatpush.msra.mxu0 %v27
    %60 = vmatmul.f32.gmra.mxu0 %v33
    %v61 = vpop.f32.mrf.mxu0
    %v62 = vadd.f32 0.0, %v61
    %63 = vmatmul.f32.gmra.mxu0 %v36
    %v64 = vpop.f32.mrf.mxu0
    %v65 = vadd.f32 0.0, %v64
    %66 = vmatmul.f32.gmra.mxu0 %v39
    %v67 = vpop.f32.mrf.mxu0
    %v68 = vadd.f32 0.0, %v67
    %69 = vmatmul.f32.gmra.mxu0 %v42
    %v70 = vpop.f32.mrf.mxu0
    %v71 = vadd.f32 0.0, %v70
    %72 = vdwg.mxu0
    %v73 = vperm.slane %v26, 0
    %v75 = vsel %vm31, %v18, 0
    %v78 = vsel %vm31, %v19, 0
    %v81 = vsel %vm31, %v20, 0
    %v84 = vsel %vm31, %v21, 0
    %86 = vmatpush.msra.mxu0 0.0
    %87 = vmatpush.msra.mxu0 0.0
    %88 = vmatpush.msra.mxu0 0.0
    %89 = vmatpush.msra.mxu0 0.0
    %90 = vmatpush.msra.mxu0 0.0
    %91 = vmatpush.msra.mxu0 0.0
    %92 = vmatpush.msra.mxu0 0.0
    %93 = vmatpush.msra.mxu0 0.0
    %94 = vmatpush.msra.mxu0 0.0
    %95 = vmatpush.msra.mxu0 0.0
    %96 = vmatpush.msra.mxu0 0.0
    %97 = vmatpush.msra.mxu0 0.0
    %98 = vmatpush.msra.mxu0 %v71
    %99 = vmatpush.msra.mxu0 %v68
    %100 = vmatpush.msra.mxu0 %v65
    %101 = vmatpush.msra.mxu0 %v62
    %102 = vmatmul.f32.gmra.mxu0 %v75
    %v103 = vpop.f32.mrf.mxu0
    %v104 = vadd.f32 %v73, %v103
    %105 = vmatmul.f32.gmra.mxu0 %v78
    %v106 = vpop.f32.mrf.mxu0
    %v107 = vadd.f32 %v73, %v106
    %108 = vmatmul.f32.gmra.mxu0 %v81
    %v109 = vpop.f32.mrf.mxu0
    %v110 = vadd.f32 %v73, %v109
    %111 = vmatmul.f32.gmra.mxu0 %v84
    %v112 = vpop.f32.mrf.mxu0
    %v113 = vadd.f32 %v73, %v112
    %114 = vdwg.mxu0
    %v116 = vsel %vm31, %v104, 0
    %v119 = vsel %vm31, %v107, 0
    %121 = vmatpush.xpose.msra.mxu0 0.0
    %122 = vmatpush.xpose.msra.mxu0 0.0
    %123 = vmatpush.xpose.msra.mxu0 0.0
    %124 = vmatpush.xpose.msra.mxu0 0.0
    %125 = vmatpush.xpose.msra.mxu0 0.0
    %126 = vmatpush.xpose.msra.mxu0 0.0
    %127 = vmatpush.xpose.msra.mxu0 0.0
    %128 = vmatpush.xpose.msra.mxu0 0.0
    %129 = vmatpush.xpose.msra.mxu0 0.0
    %130 = vmatpush.xpose.msra.mxu0 0.0
    %131 = vmatpush.xpose.msra.mxu0 0.0
    %132 = vmatpush.xpose.msra.mxu0 0.0
    %133 = vmatpush.xpose.msra.mxu0 0.0
    %134 = vmatpush.xpose.msra.mxu0 0.0
    %135 = vmatpush.xpose.msra.mxu0 0.0
    %136 = vmatpush.xpose.msra.mxu0 %v119
    %137 = vmatmul.f32.gmra.mxu0 %v116
    %v138 = vpop.f32.mrf.mxu0
    %v139 = vadd.f32 0.0, %v138
    %140 = vdwg.mxu0
    %v141 = vsub.f32 0.0, %v139
    %v142 = vperm.slane %v26, 1
    %v143 = vmul.f32 %v104, %v142
    %v144 = vsel %vm31, %v143, 0.0
    %145 = vadd.xlane.f32.xlu0 %v144
    %v146 = vpop.xlane.xlu0 %145
    %v147 = vsub.f32 0.0, %v146
    %v148 = vperm.slane %v26, 2
    %v149 = vmul.f32 %v107, %v148
    %v150 = vsel %vm31, %v149, 0.0
    %151 = vadd.xlane.f32.xlu0 %v150
    %v152 = vpop.xlane.xlu0 %151
    %v153 = vsub.f32 0.0, %v152
    %vm154 = vcmask 64512
    %v155 = vsel %vm154, %v141, %v147
    %vm156 = vcmask 72704
    %v157 = vsel %vm156, %v155, %v153
    %vm158 = vcmask 80896
    %v159 = vsel %vm158, %v157, 0.0
    %v161 = vsel %vm31, %v110, 0
    %v164 = vsel %vm31, %v113, 0
    %166 = vmatpush.xpose.msra.mxu0 0.0
    %167 = vmatpush.xpose.msra.mxu0 0.0
    %168 = vmatpush.xpose.msra.mxu0 0.0
    %169 = vmatpush.xpose.msra.mxu0 0.0
    %170 = vmatpush.xpose.msra.mxu0 0.0
    %171 = vmatpush.xpose.msra.mxu0 0.0
    %172 = vmatpush.xpose.msra.mxu0 0.0
    %173 = vmatpush.xpose.msra.mxu0 0.0
    %174 = vmatpush.xpose.msra.mxu0 0.0
    %175 = vmatpush.xpose.msra.mxu0 0.0
    %176 = vmatpush.xpose.msra.mxu0 0.0
    %177 = vmatpush.xpose.msra.mxu0 0.0
    %178 = vmatpush.xpose.msra.mxu0 0.0
    %179 = vmatpush.xpose.msra.mxu0 0.0
    %180 = vmatpush.xpose.msra.mxu0 0.0
    %181 = vmatpush.xpose.msra.mxu0 %v164
    %182 = vmatmul.f32.gmra.mxu0 %v161
    %v183 = vpop.f32.mrf.mxu0
    %v184 = vadd.f32 0.0, %v183
    %185 = vdwg.mxu0
    %v186 = vsub.f32 0.0, %v184
    %v187 = vmul.f32 %v110, %v142
    %v188 = vsel %vm31, %v187, 0.0
    %189 = vadd.xlane.f32.xlu0 %v188
    %v190 = vpop.xlane.xlu0 %189
    %v191 = vsub.f32 0.0, %v190
    %v192 = vmul.f32 %v113, %v148
    %v193 = vsel %vm31, %v192, 0.0
    %194 = vadd.xlane.f32.xlu0 %v193
    %v195 = vpop.xlane.xlu0 %194
    %v196 = vsub.f32 0.0, %v195
    %v197 = vsel %vm154, %v186, %v191
    %v198 = vsel %vm156, %v197, %v196
    %v199 = vsel %vm158, %v198, 0.0
    %v200 = vmax.f32 %v104, 0.0
    %v201 = vmax.f32 %v107, 0.0
    %v202 = vmax.f32 %v110, 0.0
    %v203 = vmax.f32 %v113, 0.0
    %s204 = scalar_lea.vmem %s3, 4
    %v205 = vld [vmem:[%s204] sm:$0x7]
    %s206 = scalar_lea.vmem %s2, 32
    %v207 = vld [vmem:[%s206] sm:$0xff]
    %v208 = vld [vmem:[%s206 + $0x8] sm:$0xff]
    %v209 = vld [vmem:[%s206 + $0x10] sm:$0xff]
    %v210 = vld [vmem:[%s206 + $0x18] sm:$0xff]
    %v212 = vsel %vm31, %v200, 0
    %v215 = vsel %vm31, %v201, 0
    %v218 = vsel %vm31, %v202, 0
    %v221 = vsel %vm31, %v203, 0
    %223 = vmatpush.msra.mxu0 0.0
    %224 = vmatpush.msra.mxu0 0.0
    %225 = vmatpush.msra.mxu0 0.0
    %226 = vmatpush.msra.mxu0 0.0
    %227 = vmatpush.msra.mxu0 0.0
    %228 = vmatpush.msra.mxu0 0.0
    %229 = vmatpush.msra.mxu0 0.0
    %230 = vmatpush.msra.mxu0 0.0
    %231 = vmatpush.msra.mxu0 0.0
    %232 = vmatpush.msra.mxu0 0.0
    %233 = vmatpush.msra.mxu0 0.0
    %234 = vmatpush.msra.mxu0 0.0
    %235 = vmatpush.msra.mxu0 %v210
    %236 = vmatpush.msra.mxu0 %v209
    %237 = vmatpush.msra.mxu0 %v208
    %238 = vmatpush.msra.mxu0 %v207
    %239 = vmatmul.f32.gmra.mxu0 %v212
    %v240 = vpop.f32.mrf.mxu0
    %v241 = vadd.f32 0.0, %v240
    %242 = vmatmul.f32.gmra.mxu0 %v215
    %v243 = vpop.f32.mrf.mxu0
    %v244 = vadd.f32 0.0, %v243
    %245 = vmatmul.f32.gmra.mxu0 %v218
    %v246 = vpop.f32.mrf.mxu0
    %v247 = vadd.f32 0.0, %v246
    %248 = vmatmul.f32.gmra.mxu0 %v221
    %v249 = vpop.f32.mrf.mxu0
    %v250 = vadd.f32 0.0, %v249
    %251 = vdwg.mxu0
    %v252 = vperm.slane %v205, 0
    %253 = vmatpush.msra.mxu0 0.0
    %254 = vmatpush.msra.mxu0 0.0
    %255 = vmatpush.msra.mxu0 0.0
    %256 = vmatpush.msra.mxu0 0.0
    %257 = vmatpush.msra.mxu0 0.0
    %258 = vmatpush.msra.mxu0 0.0
    %259 = vmatpush.msra.mxu0 0.0
    %260 = vmatpush.msra.mxu0 0.0
    %261 = vmatpush.msra.mxu0 0.0
    %262 = vmatpush.msra.mxu0 0.0
    %263 = vmatpush.msra.mxu0 0.0
    %264 = vmatpush.msra.mxu0 0.0
    %265 = vmatpush.msra.mxu0 %v250
    %266 = vmatpush.msra.mxu0 %v247
    %267 = vmatpush.msra.mxu0 %v244
    %268 = vmatpush.msra.mxu0 %v241
    %269 = vmatmul.f32.gmra.mxu0 %v75
    %v270 = vpop.f32.mrf.mxu0
    %v271 = vadd.f32 %v252, %v270
    %272 = vmatmul.f32.gmra.mxu0 %v78
    %v273 = vpop.f32.mrf.mxu0
    %v274 = vadd.f32 %v252, %v273
    %275 = vmatmul.f32.gmra.mxu0 %v81
    %v276 = vpop.f32.mrf.mxu0
    %v277 = vadd.f32 %v252, %v276
    %278 = vmatmul.f32.gmra.mxu0 %v84
    %v279 = vpop.f32.mrf.mxu0
    %v280 = vadd.f32 %v252, %v279
    %281 = vdwg.mxu0
    %v283 = vsel %vm31, %v271, 0
    %v286 = vsel %vm31, %v274, 0
    %288 = vmatpush.xpose.msra.mxu0 0.0
    %289 = vmatpush.xpose.msra.mxu0 0.0
    %290 = vmatpush.xpose.msra.mxu0 0.0
    %291 = vmatpush.xpose.msra.mxu0 0.0
    %292 = vmatpush.xpose.msra.mxu0 0.0
    %293 = vmatpush.xpose.msra.mxu0 0.0
    %294 = vmatpush.xpose.msra.mxu0 0.0
    %295 = vmatpush.xpose.msra.mxu0 0.0
    %296 = vmatpush.xpose.msra.mxu0 0.0
    %297 = vmatpush.xpose.msra.mxu0 0.0
    %298 = vmatpush.xpose.msra.mxu0 0.0
    %299 = vmatpush.xpose.msra.mxu0 0.0
    %300 = vmatpush.xpose.msra.mxu0 0.0
    %301 = vmatpush.xpose.msra.mxu0 0.0
    %302 = vmatpush.xpose.msra.mxu0 0.0
    %303 = vmatpush.xpose.msra.mxu0 %v286
    %304 = vmatmul.f32.gmra.mxu0 %v283
    %v305 = vpop.f32.mrf.mxu0
    %v306 = vadd.f32 0.0, %v305
    %307 = vdwg.mxu0
    %v308 = vsub.f32 0.0, %v306
    %v309 = vperm.slane %v205, 1
    %v310 = vmul.f32 %v271, %v309
    %v311 = vsel %vm31, %v310, 0.0
    %312 = vadd.xlane.f32.xlu0 %v311
    %v313 = vpop.xlane.xlu0 %312
    %v314 = vsub.f32 0.0, %v313
    %v315 = vperm.slane %v205, 2
    %v316 = vmul.f32 %v274, %v315
    %v317 = vsel %vm31, %v316, 0.0
    %318 = vadd.xlane.f32.xlu0 %v317
    %v319 = vpop.xlane.xlu0 %318
    %v320 = vsub.f32 0.0, %v319
    %v321 = vsel %vm154, %v308, %v314
    %v322 = vsel %vm156, %v321, %v320
    %v323 = vsel %vm158, %v322, 0.0
    %v325 = vsel %vm31, %v277, 0
    %v328 = vsel %vm31, %v280, 0
    %330 = vmatpush.xpose.msra.mxu0 0.0
    %331 = vmatpush.xpose.msra.mxu0 0.0
    %332 = vmatpush.xpose.msra.mxu0 0.0
    %333 = vmatpush.xpose.msra.mxu0 0.0
    %334 = vmatpush.xpose.msra.mxu0 0.0
    %335 = vmatpush.xpose.msra.mxu0 0.0
    %336 = vmatpush.xpose.msra.mxu0 0.0
    %337 = vmatpush.xpose.msra.mxu0 0.0
    %338 = vmatpush.xpose.msra.mxu0 0.0
    %339 = vmatpush.xpose.msra.mxu0 0.0
    %340 = vmatpush.xpose.msra.mxu0 0.0
    %341 = vmatpush.xpose.msra.mxu0 0.0
    %342 = vmatpush.xpose.msra.mxu0 0.0
    %343 = vmatpush.xpose.msra.mxu0 0.0
    %344 = vmatpush.xpose.msra.mxu0 0.0
    %345 = vmatpush.xpose.msra.mxu0 %v328
    %346 = vmatmul.f32.gmra.mxu0 %v325
    %v347 = vpop.f32.mrf.mxu0
    %v348 = vadd.f32 0.0, %v347
    %349 = vdwg.mxu0
    %v350 = vsub.f32 0.0, %v348
    %v351 = vmul.f32 %v277, %v309
    %v352 = vsel %vm31, %v351, 0.0
    %353 = vadd.xlane.f32.xlu0 %v352
    %v354 = vpop.xlane.xlu0 %353
    %v355 = vsub.f32 0.0, %v354
    %v356 = vmul.f32 %v280, %v315
    %v357 = vsel %vm31, %v356, 0.0
    %358 = vadd.xlane.f32.xlu0 %v357
    %v359 = vpop.xlane.xlu0 %358
    %v360 = vsub.f32 0.0, %v359
    %v361 = vsel %vm154, %v350, %v355
    %v362 = vsel %vm156, %v361, %v360
    %v363 = vsel %vm158, %v362, 0.0
    %v364 = vmax.f32 %v271, 0.0
    %v365 = vmax.f32 %v274, 0.0
    %v366 = vmax.f32 %v277, 0.0
    %v367 = vmax.f32 %v280, 0.0
    %s368 = scalar_lea.vmem %s3, 8
    %v369 = vld [vmem:[%s368] sm:$0x7]
    %s370 = scalar_lea.vmem %s2, 64
    %v371 = vld [vmem:[%s370] sm:$0xff]
    %v372 = vld [vmem:[%s370 + $0x8] sm:$0xff]
    %v373 = vld [vmem:[%s370 + $0x10] sm:$0xff]
    %v374 = vld [vmem:[%s370 + $0x18] sm:$0xff]
    %v376 = vsel %vm31, %v364, 0
    %v379 = vsel %vm31, %v365, 0
    %v382 = vsel %vm31, %v366, 0
    %v385 = vsel %vm31, %v367, 0
    %387 = vmatpush.msra.mxu0 0.0
    %388 = vmatpush.msra.mxu0 0.0
    %389 = vmatpush.msra.mxu0 0.0
    %390 = vmatpush.msra.mxu0 0.0
    %391 = vmatpush.msra.mxu0 0.0
    %392 = vmatpush.msra.mxu0 0.0
    %393 = vmatpush.msra.mxu0 0.0
    %394 = vmatpush.msra.mxu0 0.0
    %395 = vmatpush.msra.mxu0 0.0
    %396 = vmatpush.msra.mxu0 0.0
    %397 = vmatpush.msra.mxu0 0.0
    %398 = vmatpush.msra.mxu0 0.0
    %399 = vmatpush.msra.mxu0 %v374
    %400 = vmatpush.msra.mxu0 %v373
    %401 = vmatpush.msra.mxu0 %v372
    %402 = vmatpush.msra.mxu0 %v371
    %403 = vmatmul.f32.gmra.mxu0 %v376
    %v404 = vpop.f32.mrf.mxu0
    %v405 = vadd.f32 0.0, %v404
    %406 = vmatmul.f32.gmra.mxu0 %v379
    %v407 = vpop.f32.mrf.mxu0
    %v408 = vadd.f32 0.0, %v407
    %409 = vmatmul.f32.gmra.mxu0 %v382
    %v410 = vpop.f32.mrf.mxu0
    %v411 = vadd.f32 0.0, %v410
    %412 = vmatmul.f32.gmra.mxu0 %v385
    %v413 = vpop.f32.mrf.mxu0
    %v414 = vadd.f32 0.0, %v413
    %415 = vdwg.mxu0
    %v416 = vperm.slane %v369, 0
    %417 = vmatpush.msra.mxu0 0.0
    %418 = vmatpush.msra.mxu0 0.0
    %419 = vmatpush.msra.mxu0 0.0
    %420 = vmatpush.msra.mxu0 0.0
    %421 = vmatpush.msra.mxu0 0.0
    %422 = vmatpush.msra.mxu0 0.0
    %423 = vmatpush.msra.mxu0 0.0
    %424 = vmatpush.msra.mxu0 0.0
    %425 = vmatpush.msra.mxu0 0.0
    %426 = vmatpush.msra.mxu0 0.0
    %427 = vmatpush.msra.mxu0 0.0
    %428 = vmatpush.msra.mxu0 0.0
    %429 = vmatpush.msra.mxu0 %v414
    %430 = vmatpush.msra.mxu0 %v411
    %431 = vmatpush.msra.mxu0 %v408
    %432 = vmatpush.msra.mxu0 %v405
    %433 = vmatmul.f32.gmra.mxu0 %v75
    %v434 = vpop.f32.mrf.mxu0
    %v435 = vadd.f32 %v416, %v434
    %436 = vmatmul.f32.gmra.mxu0 %v78
    %v437 = vpop.f32.mrf.mxu0
    %v438 = vadd.f32 %v416, %v437
    %439 = vmatmul.f32.gmra.mxu0 %v81
    %v440 = vpop.f32.mrf.mxu0
    %v441 = vadd.f32 %v416, %v440
    %442 = vmatmul.f32.gmra.mxu0 %v84
    %v443 = vpop.f32.mrf.mxu0
    %v444 = vadd.f32 %v416, %v443
    %445 = vdwg.mxu0
    %v447 = vsel %vm31, %v435, 0
    %v450 = vsel %vm31, %v438, 0
    %452 = vmatpush.xpose.msra.mxu0 0.0
    %453 = vmatpush.xpose.msra.mxu0 0.0
    %454 = vmatpush.xpose.msra.mxu0 0.0
    %455 = vmatpush.xpose.msra.mxu0 0.0
    %456 = vmatpush.xpose.msra.mxu0 0.0
    %457 = vmatpush.xpose.msra.mxu0 0.0
    %458 = vmatpush.xpose.msra.mxu0 0.0
    %459 = vmatpush.xpose.msra.mxu0 0.0
    %460 = vmatpush.xpose.msra.mxu0 0.0
    %461 = vmatpush.xpose.msra.mxu0 0.0
    %462 = vmatpush.xpose.msra.mxu0 0.0
    %463 = vmatpush.xpose.msra.mxu0 0.0
    %464 = vmatpush.xpose.msra.mxu0 0.0
    %465 = vmatpush.xpose.msra.mxu0 0.0
    %466 = vmatpush.xpose.msra.mxu0 0.0
    %467 = vmatpush.xpose.msra.mxu0 %v450
    %468 = vmatmul.f32.gmra.mxu0 %v447
    %v469 = vpop.f32.mrf.mxu0
    %v470 = vadd.f32 0.0, %v469
    %471 = vdwg.mxu0
    %v472 = vsub.f32 0.0, %v470
    %v473 = vperm.slane %v369, 1
    %v474 = vmul.f32 %v435, %v473
    %v475 = vsel %vm31, %v474, 0.0
    %476 = vadd.xlane.f32.xlu0 %v475
    %v477 = vpop.xlane.xlu0 %476
    %v478 = vsub.f32 0.0, %v477
    %v479 = vperm.slane %v369, 2
    %v480 = vmul.f32 %v438, %v479
    %v481 = vsel %vm31, %v480, 0.0
    %482 = vadd.xlane.f32.xlu0 %v481
    %v483 = vpop.xlane.xlu0 %482
    %v484 = vsub.f32 0.0, %v483
    %v485 = vsel %vm154, %v472, %v478
    %v486 = vsel %vm156, %v485, %v484
    %v487 = vsel %vm158, %v486, 0.0
    %v489 = vsel %vm31, %v441, 0
    %v492 = vsel %vm31, %v444, 0
    %494 = vmatpush.xpose.msra.mxu0 0.0
    %495 = vmatpush.xpose.msra.mxu0 0.0
    %496 = vmatpush.xpose.msra.mxu0 0.0
    %497 = vmatpush.xpose.msra.mxu0 0.0
    %498 = vmatpush.xpose.msra.mxu0 0.0
    %499 = vmatpush.xpose.msra.mxu0 0.0
    %500 = vmatpush.xpose.msra.mxu0 0.0
    %501 = vmatpush.xpose.msra.mxu0 0.0
    %502 = vmatpush.xpose.msra.mxu0 0.0
    %503 = vmatpush.xpose.msra.mxu0 0.0
    %504 = vmatpush.xpose.msra.mxu0 0.0
    %505 = vmatpush.xpose.msra.mxu0 0.0
    %506 = vmatpush.xpose.msra.mxu0 0.0
    %507 = vmatpush.xpose.msra.mxu0 0.0
    %508 = vmatpush.xpose.msra.mxu0 0.0
    %509 = vmatpush.xpose.msra.mxu0 %v492
    %510 = vmatmul.f32.gmra.mxu0 %v489
    %v511 = vpop.f32.mrf.mxu0
    %v512 = vadd.f32 0.0, %v511
    %513 = vdwg.mxu0
    %v514 = vsub.f32 0.0, %v512
    %v515 = vmul.f32 %v441, %v473
    %v516 = vsel %vm31, %v515, 0.0
    %517 = vadd.xlane.f32.xlu0 %v516
    %v518 = vpop.xlane.xlu0 %517
    %v519 = vsub.f32 0.0, %v518
    %v520 = vmul.f32 %v444, %v479
    %v521 = vsel %vm31, %v520, 0.0
    %522 = vadd.xlane.f32.xlu0 %v521
    %v523 = vpop.xlane.xlu0 %522
    %v524 = vsub.f32 0.0, %v523
    %v525 = vsel %vm154, %v514, %v519
    %v526 = vsel %vm156, %v525, %v524
    %v527 = vsel %vm158, %v526, 0.0
    %529 = vrot.lane.b32.xlu0 %v199, 16
    %v530 = vpop.permute.xlu0 %529
    %533 = vrot.lane.b32.xlu0 %v323, 32
    %v534 = vpop.permute.xlu0 %533
    %537 = vrot.lane.b32.xlu0 %v363, 48
    %v538 = vpop.permute.xlu0 %537
    %541 = vrot.lane.b32.xlu0 %v487, 64
    %v542 = vpop.permute.xlu0 %541
    %545 = vrot.lane.b32.xlu0 %v527, 80
    %v546 = vpop.permute.xlu0 %545
    %vm548 = vcmask 130048
    %v549 = vsel %vm548, %v159, %v530
    %v550 = vsel %vm31, %v549, %v534
    %vm551 = vcmask 392192
    %v552 = vsel %vm551, %v550, %v538
    %vm553 = vcmask 523264
    %v554 = vsel %vm553, %v552, %v542
    %vm555 = vcmask 654336
    %v556 = vsel %vm555, %v554, %v546
    %vm557 = vcmask 785408
    %v558 = vsel %vm557, %v556, 0.0
    %559 = vst [vmem:[#allocation2] sm:$0xff] %v558
    // Predicated region
    $region18: #{gotsim_device.1} parent=1 // pred_check
      _
    $region19: #{gotsim_device.1} parent=1 // pred_check_branch
      %561 = sbr.rel (0) target = $region21
    $region20: #{gotsim_device.1} parent=1 // pred_region
      %563 = vsyncadd [#allocation3], 0
      %s565 = sshll.u32 [#allocation2], 4
      %s566 = int_to_ptr.vmem [resolvable:$true] %s565
      %s567 = sshll.u32 %s4, 4
      %s568 = int_to_ptr.hbm [resolvable:$true] %s567
      %570 = dma.vmem_to_hbm [thread:$0]  %s566, 128, %s568, [#allocation3]
    $region21: #{gotsim_device.1} parent=1 // pred_fallthru
      _
    // Predicated region
    $region22: #{gotsim_device.1} parent=1 // pred_check
      _
    $region23: #{gotsim_device.1} parent=1 // pred_check_branch
      %572 = sbr.rel (0) target = $region25
    $region24: #{gotsim_device.1} parent=1 // pred_region
      %574 = dma.done [#allocation3], 128
    $region25: #{gotsim_device.1} parent=1 // pred_fallthru
      _
    %575 = vsyncpa [#allocation3], 1

</llo_original>
